<compile_context>
chip_gen: v5e
topology: v5e:2x2
jax: 0.10.0
libtpu: 0.0.40
codegen_flags: <defaults>
</compile_context>

<pallas_src>
import math

import jax
import jax.numpy as jnp
from jax.experimental import pallas as pl
from jax.experimental.pallas import tpu as pltpu


def _round_up(x, m):
    return (x + m - 1) // m * m


def _cdiv(a, b):
    return (a + b - 1) // b


def _pad_to(a, shape, dtype):
    """Cast + zero-pad to `shape`; skips the pad entirely when already aligned."""
    a = a.astype(dtype)
    if tuple(a.shape) == tuple(shape):
        return a
    return jnp.pad(a, [(0, t - s) for s, t in zip(a.shape, shape)])


def _activate(h, act_fn):
    if act_fn == "relu":
        return jnp.maximum(h, 0.0)
    if act_fn == "gelu":  # erf-based gelu, as in the original BERT repo
        return h * 0.5 * (1.0 + jax.lax.erf(h * (1.0 / math.sqrt(2.0))))
    raise ValueError(f"unsupported act_fn: {act_fn}")


def _resident_kernel(act_fn):
    """Whole FFN in one body; W1/W2/b1/b2 fully resident in VMEM (read once)."""
    def kernel(x_ref, w1_ref, b1_ref, w2_ref, b2_ref, o_ref):
        # x_ref: (TM, H) bf16, w1_ref: (H, I) bf16, b1_ref: (1, I) f32
        # w2_ref: (I, O_pad) bf16, b2_ref: (1, O_pad) f32, o_ref: (TM, O_pad)
        h = jnp.dot(x_ref[...], w1_ref[...], preferred_element_type=jnp.float32)
        h = _activate(h + b1_ref[...], act_fn)
        y = jnp.dot(h.astype(w2_ref.dtype), w2_ref[...],
                    preferred_element_type=jnp.float32)
        o_ref[...] = (y + b2_ref[...]).astype(o_ref.dtype)
    return kernel


def _streaming_kernel(act_fn):
    """Intermediate dim streamed in ti blocks with an f32 VMEM accumulator."""
    def kernel(x_ref, w1_ref, b1_ref, w2_ref, b2_ref, o_ref, acc_ref):
        k = pl.program_id(1)

        @pl.when(k == 0)
        def _():
            acc_ref[...] = jnp.zeros_like(acc_ref)

        h = jnp.dot(x_ref[...], w1_ref[...], preferred_element_type=jnp.float32)
        h = _activate(h + b1_ref[...], act_fn)
        acc_ref[...] += jnp.dot(h.astype(w2_ref.dtype), w2_ref[...],
                                preferred_element_type=jnp.float32)

        @pl.when(k == pl.num_programs(1) - 1)
        def _():
            o_ref[...] = (acc_ref[...] + b2_ref[...]).astype(o_ref.dtype)
    return kernel


def feed_forward_net(x, w1, b1, w2, b2, *, act_fn="relu", tm=512, ti=1024,
                     compute_dtype=jnp.bfloat16,
                     vmem_budget_bytes=48 * 1024 * 1024,
                     force_streaming=False):
    """x: (batch, seq, hidden) -> (batch, seq, output).

    w1: (hidden, intermediate), w2: (intermediate, output)   [PyTorch W.T]
    """
    B, S, H = x.shape
    I = w1.shape[1]
    O = w2.shape[1]
    M = B * S
    out_dtype = x.dtype
    cdt = jnp.dtype(compute_dtype).itemsize
    odt = jnp.dtype(out_dtype).itemsize

    # Row tile: multiple of 16 (bf16 sublane packing). Keep >= 2 row tiles when
    # M is big enough so the "parallel" M axis splits across v7x's 2 TensorCores.
    tm_eff = min(tm, _round_up(M, 16))
    if M > 256 and _cdiv(M, tm_eff) < 2:
        tm_eff = _round_up(_cdiv(M, 2), 16)
    M_pad = _round_up(M, tm_eff)
    grid_m = M_pad // tm_eff

    O_pad = _round_up(O, 128)      # lane-dense output stores (no vst.msk)
    I_res = _round_up(I, 128)

    # Conservative VMEM footprint of the weights-resident form (assumes the
    # pipeline still allocates two buffers for the block-invariant weights).
    resident_bytes = (
        2 * (H * I_res + I_res * O_pad) * cdt        # W1 + W2
        + 2 * (I_res + O_pad) * 4                    # b1 + b2
        + 2 * tm_eff * H * cdt                       # x tile (double buffered)
        + 2 * tm_eff * O_pad * odt                   # out tile (double buffered)
        + tm_eff * I_res * (4 + cdt)                 # f32 h temp + bf16 cast
        + tm_eff * O_pad * 4)                        # f32 y temp

    use_streaming = force_streaming or (resident_bytes > vmem_budget_bytes)

    if not use_streaming:
        # ---------- weights-resident path: weights read from HBM exactly once.
        I_pad = I_res
        x2 = _pad_to(x.reshape(M, H), (M_pad, H), compute_dtype)
        w1p = _pad_to(w1, (H, I_pad), compute_dtype)
        b1p = _pad_to(b1.reshape(1, I), (1, I_pad), jnp.float32)
        w2p = _pad_to(w2, (I_pad, O_pad), compute_dtype)
        b2p = _pad_to(b2.reshape(1, O), (1, O_pad), jnp.float32)

        flops = 2 * M_pad * (H * I_pad + I_pad * O_pad)
        bytes_accessed = (x2.size * cdt + w1p.size * cdt + w2p.size * cdt
                          + b1p.size * 4 + b2p.size * 4 + M_pad * O_pad * odt)
        vmem_limit = int(min(vmem_budget_bytes,
                             max(16 << 20, resident_bytes + (8 << 20))))

        out = pl.pallas_call(
            _resident_kernel(act_fn),
            out_shape=jax.ShapeDtypeStruct((M_pad, O_pad), out_dtype),
            grid_spec=pltpu.PrefetchScalarGridSpec(
                num_scalar_prefetch=0,
                grid=(grid_m,),
                in_specs=[
                    pl.BlockSpec((tm_eff, H), lambda i: (i, 0)),       # x row tile
                    pl.BlockSpec((H, I_pad), lambda i: (0, 0)),        # W1 resident
                    pl.BlockSpec((1, I_pad), lambda i: (0, 0)),        # b1 resident
                    pl.BlockSpec((I_pad, O_pad), lambda i: (0, 0)),    # W2 resident
                    pl.BlockSpec((1, O_pad), lambda i: (0, 0)),        # b2 resident
                ],
                out_specs=pl.BlockSpec((tm_eff, O_pad), lambda i: (i, 0)),
            ),
            compiler_params=pltpu.CompilerParams(
                dimension_semantics=("parallel",),
                vmem_limit_bytes=vmem_limit,
            ),
            cost_estimate=pl.CostEstimate(
                flops=int(flops),
                transcendentals=int(M_pad * I_pad) if act_fn == "gelu" else 0,
                bytes_accessed=int(bytes_accessed)),
        )(x2, w1p, b1p, w2p, b2p)
    else:
        # ---------- I-streaming fallback: bounded VMEM, f32 accumulator over k.
        ti_eff = min(ti, _round_up(I, 128))

        def stream_bytes(t):
            return (2 * tm_eff * H * cdt            # x tile
                    + 2 * H * t * cdt               # W1 block
                    + 2 * t * 4                     # b1 block
                    + 2 * t * O_pad * cdt           # W2 block
                    + 2 * O_pad * 4                 # b2
                    + 2 * tm_eff * O_pad * odt      # out tile
                    + tm_eff * O_pad * 4            # acc scratch
                    + tm_eff * t * (4 + cdt))       # f32 h temp + bf16 cast

        while stream_bytes(ti_eff) > vmem_budget_bytes and ti_eff > 128:
            ti_eff = max(128, _round_up(ti_eff // 2, 128))

        I_pad = _round_up(I, ti_eff)
        grid_k = I_pad // ti_eff

        x2 = _pad_to(x.reshape(M, H), (M_pad, H), compute_dtype)
        w1p = _pad_to(w1, (H, I_pad), compute_dtype)
        b1p = _pad_to(b1.reshape(1, I), (1, I_pad), jnp.float32)
        w2p = _pad_to(w2, (I_pad, O_pad), compute_dtype)
        b2p = _pad_to(b2.reshape(1, O), (1, O_pad), jnp.float32)

        flops = 2 * M_pad * (H * I_pad + I_pad * O_pad)
        # W1 / W2 / b1 are re-streamed from HBM once per row tile.
        bytes_accessed = (x2.size * cdt
                          + grid_m * (w1p.size * cdt + w2p.size * cdt
                                      + b1p.size * 4)
                          + b2p.size * 4 + M_pad * O_pad * odt)
        vmem_limit = int(min(vmem_budget_bytes,
                             max(16 << 20, stream_bytes(ti_eff) + (8 << 20))))

        out = pl.pallas_call(
            _streaming_kernel(act_fn),
            out_shape=jax.ShapeDtypeStruct((M_pad, O_pad), out_dtype),
            grid_spec=pltpu.PrefetchScalarGridSpec(
                num_scalar_prefetch=0,
                grid=(grid_m, grid_k),
                in_specs=[
                    pl.BlockSpec((tm_eff, H), lambda i, k: (i, 0)),      # x row tile
                    pl.BlockSpec((H, ti_eff), lambda i, k: (0, k)),      # W1 I-block
                    pl.BlockSpec((1, ti_eff), lambda i, k: (0, k)),      # b1 I-block
                    pl.BlockSpec((ti_eff, O_pad), lambda i, k: (k, 0)),  # W2 I-block
                    pl.BlockSpec((1, O_pad), lambda i, k: (0, 0)),       # b2
                ],
                out_specs=pl.BlockSpec((tm_eff, O_pad), lambda i, k: (i, 0)),
                scratch_shapes=[pltpu.VMEM((tm_eff, O_pad), jnp.float32)],
            ),
            compiler_params=pltpu.CompilerParams(
                dimension_semantics=("parallel", "arbitrary"),
                vmem_limit_bytes=vmem_limit,
            ),
            cost_estimate=pl.CostEstimate(
                flops=int(flops),
                transcendentals=int(M_pad * I_pad) if act_fn == "gelu" else 0,
                bytes_accessed=int(bytes_accessed)),
        )(x2, w1p, b1p, w2p, b2p)

    return out[:M, :O].reshape(B, S, O)


if __name__ == "__main__":
    # Small shapes consistent with the module: hidden=32, intermediate=64, output=32.
    B, S = 2, 8
    hidden_size, intermediate_size, output_size = 32, 64, 32

    key = jax.random.PRNGKey(0)
    kx, k1, k2, k3, k4 = jax.random.split(key, 5)

    x = jax.random.normal(kx, (B, S, hidden_size), dtype=jnp.float32)
    # Parameters stored as (in, out), i.e. PyTorch W.T.
    w1 = jax.random.normal(k1, (hidden_size, intermediate_size), jnp.float32) * 0.02
    b1 = jax.random.normal(k2, (intermediate_size,), jnp.float32) * 0.02
    w2 = jax.random.normal(k3, (intermediate_size, output_size), jnp.float32) * 0.02
    b2 = jax.random.normal(k4, (output_size,), jnp.float32) * 0.02

    # Pure-JAX reference mirroring the kernel's bf16-matmul / f32-accumulate numerics.
    cd = jnp.bfloat16
    h_ref = jnp.maximum(
        jnp.dot(x.reshape(-1, hidden_size).astype(cd), w1.astype(cd),
                preferred_element_type=jnp.float32) + b1, 0.0)
    y_ref = (jnp.dot(h_ref.astype(cd), w2.astype(cd),
                     preferred_element_type=jnp.float32) + b2
             ).reshape(B, S, output_size)

    # Weights-resident path (default for BERT-class sizes).
    y = jax.block_until_ready(feed_forward_net(x, w1, b1, w2, b2))
    assert y.shape == (B, S, output_size)
    assert jnp.allclose(y, y_ref, atol=1e-2, rtol=1e-2), \
        float(jnp.max(jnp.abs(y - y_ref)))

    # I-streaming fallback path (auto-chosen when weights exceed the VMEM budget).
    y_s = jax.block_until_ready(
        feed_forward_net(x, w1, b1, w2, b2, force_streaming=True))
    assert jnp.allclose(y_s, y_ref, atol=1e-2, rtol=1e-2), \
        float(jnp.max(jnp.abs(y_s - y_ref)))

    print("KERNEL_OK")
</pallas_src>

<mosaic_0001>
module attributes {stable_mosaic.version = 11 : i64} {
  func.func @kernel(%arg0: i32, %arg1: memref<16x32xbf16, #tpu.memory_space<vmem>>, %arg2: memref<32x128xbf16, #tpu.memory_space<vmem>>, %arg3: memref<1x128xf32, #tpu.memory_space<vmem>>, %arg4: memref<128x128xbf16, #tpu.memory_space<vmem>>, %arg5: memref<1x128xf32, #tpu.memory_space<vmem>>, %arg6: memref<16x128xf32, #tpu.memory_space<vmem>>) attributes {dimension_semantics = [#tpu.dimension_semantics<parallel>], iteration_bounds = array<i64: 1>, scalar_prefetch = 0 : i64, scratch_operands = 0 : i64, tpu.core_type = #tpu.core_type<tc>, window_params = [{transform_indices = @transform_0, window_bounds = array<i64: 16, 32>}, {pipeline_mode = #tpu.pipeline_mode<synchronous>, transform_indices = @transform_1, window_bounds = array<i64: 32, 128>}, {pipeline_mode = #tpu.pipeline_mode<synchronous>, transform_indices = @transform_2, window_bounds = array<i64: 1, 128>}, {pipeline_mode = #tpu.pipeline_mode<synchronous>, transform_indices = @transform_3, window_bounds = array<i64: 128, 128>}, {pipeline_mode = #tpu.pipeline_mode<synchronous>, transform_indices = @transform_4, window_bounds = array<i64: 1, 128>}, {transform_indices = @transform_5, window_bounds = array<i64: 16, 128>}]} {
    %c0 = arith.constant 0 : index
    %c0_0 = arith.constant 0 : index
    %0 = vector.load %arg1[%c0, %c0_0] : memref<16x32xbf16, #tpu.memory_space<vmem>>, vector<16x32xbf16>
    %c0_1 = arith.constant 0 : index
    %c0_2 = arith.constant 0 : index
    %1 = vector.load %arg2[%c0_1, %c0_2] : memref<32x128xbf16, #tpu.memory_space<vmem>>, vector<32x128xbf16>
    %cst = arith.constant dense<0.000000e+00> : vector<16x128xf32>
    %2 = tpu.matmul %0, %1, %cst {dimension_numbers = #tpu.dot_dimension_numbers<[1], [0], [0], [1], [0, 0, 1, 1], [], []>} : vector<16x32xbf16>, vector<32x128xbf16>, vector<16x128xf32> -> vector<16x128xf32>
    %c0_3 = arith.constant 0 : index
    %c0_4 = arith.constant 0 : index
    %3 = vector.load %arg3[%c0_3, %c0_4] : memref<1x128xf32, #tpu.memory_space<vmem>>, vector<1x128xf32>
    %4 = vector.broadcast %3 : vector<1x128xf32> to vector<16x128xf32>
    %5 = arith.addf %2, %4 : vector<16x128xf32>
    %cst_5 = arith.constant 0.000000e+00 : f32
    %6 = vector.broadcast %cst_5 : f32 to vector<16x128xf32>
    %7 = arith.maximumf %5, %6 : vector<16x128xf32>
    %8 = arith.truncf %7 : vector<16x128xf32> to vector<16x128xbf16>
    %c0_6 = arith.constant 0 : index
    %c0_7 = arith.constant 0 : index
    %9 = vector.load %arg4[%c0_6, %c0_7] : memref<128x128xbf16, #tpu.memory_space<vmem>>, vector<128x128xbf16>
    %cst_8 = arith.constant dense<0.000000e+00> : vector<16x128xf32>
    %10 = tpu.matmul %8, %9, %cst_8 {dimension_numbers = #tpu.dot_dimension_numbers<[1], [0], [0], [1], [0, 0, 1, 1], [], []>} : vector<16x128xbf16>, vector<128x128xbf16>, vector<16x128xf32> -> vector<16x128xf32>
    %c0_9 = arith.constant 0 : index
    %c0_10 = arith.constant 0 : index
    %11 = vector.load %arg5[%c0_9, %c0_10] : memref<1x128xf32, #tpu.memory_space<vmem>>, vector<1x128xf32>
    %12 = vector.broadcast %11 : vector<1x128xf32> to vector<16x128xf32>
    %13 = arith.addf %10, %12 : vector<16x128xf32>
    %c0_11 = arith.constant 0 : index
    %c0_12 = arith.constant 0 : index
    %14 = vector.load %arg6[%c0_11, %c0_12] : memref<16x128xf32, #tpu.memory_space<vmem>>, vector<16x128xf32>
    tpu.vector_store %arg6[%c0_11, %c0_12], %13 {strides = array<i32>} : memref<16x128xf32, #tpu.memory_space<vmem>>, vector<16x128xf32>,
    return
  }
  func.func @transform_0(%arg0: i32) -> (i32, i32) {
    %c0_i32 = arith.constant 0 : i32
    %c0_i32_0 = arith.constant 0 : i32
    return %arg0, %c0_i32 : i32, i32
  }
  func.func @transform_1(%arg0: i32) -> (i32, i32) {
    %c0_i32 = arith.constant 0 : i32
    %c0_i32_0 = arith.constant 0 : i32
    %c0_i32_1 = arith.constant 0 : i32
    return %c0_i32, %c0_i32_0 : i32, i32
  }
  func.func @transform_2(%arg0: i32) -> (i32, i32) {
    %c0_i32 = arith.constant 0 : i32
    %c0_i32_0 = arith.constant 0 : i32
    %c0_i32_1 = arith.constant 0 : i32
    return %c0_i32, %c0_i32_0 : i32, i32
  }
  func.func @transform_3(%arg0: i32) -> (i32, i32) {
    %c0_i32 = arith.constant 0 : i32
    %c0_i32_0 = arith.constant 0 : i32
    %c0_i32_1 = arith.constant 0 : i32
    return %c0_i32, %c0_i32_0 : i32, i32
  }
  func.func @transform_4(%arg0: i32) -> (i32, i32) {
    %c0_i32 = arith.constant 0 : i32
    %c0_i32_0 = arith.constant 0 : i32
    %c0_i32_1 = arith.constant 0 : i32
    return %c0_i32, %c0_i32_0 : i32, i32
  }
  func.func @transform_5(%arg0: i32) -> (i32, i32) {
    %c0_i32 = arith.constant 0 : i32
    %c0_i32_0 = arith.constant 0 : i32
    return %arg0, %c0_i32 : i32, i32
  }
}

</mosaic_0001>

<llo_original>
// kernel: tpu_custom_call.1
$region0: #{tpu_custom_call.1}
  #allocation0 [shape = 'u32[]', space=smem, size = 0x4, offset = 0x4, fixed_abs, tag = 'smem constant byte address 0x4 - core index']
  #allocation1 [shape = 'u32[72,128]{1,0:T(1,128)}', space=vmem, size = 0x9000, scoped, tag = 'internal scratch']
  %s0 = inlined_call_operand.hbm [shape: bf16[16,32], index: 0, kind: input, shape index: {}]
  %s1 = inlined_call_operand.hbm [shape: bf16[32,128], index: 1, kind: input, shape index: {}]
  %s2 = inlined_call_operand.vmem [shape: f32[1,128], index: 2, kind: input, shape index: {}]
  %s3 = inlined_call_operand.hbm [shape: bf16[128,128], index: 3, kind: input, shape index: {}]
  %s4 = inlined_call_operand.vmem [shape: f32[1,128], index: 4, kind: input, shape index: {}]
  %s5 = inlined_call_operand.hbm [shape: f32[16,128], index: 5, kind: output, shape index: {}]
  %s6 = sld [smem:[#allocation0]]
  $region42: #{tpu_custom_call.1} parent=0
    _
  %s8 = ssub.s32 1, %s6
  %s9 = scalar_select 0, %s8, %s6
  $region1: #{tpu_custom_call.1} parent=0
    #allocation2 [shape = 'u8[4096]{0}', space=vmem, size = 0x1000, scoped, tag = 'input window, operand 0, single buffered']
    #allocation3 [shape = 's32[1]{0}', space=sflag, size = 0x4, scoped, tag = 'scoped memory for tpu_custom_call.1']
    #allocation4 [shape = 's32[1]{0}', space=sflag, size = 0x4, scoped, tag = 'scoped memory for tpu_custom_call.1']
    #allocation5 [shape = 'u8[8192]{0}', space=vmem, size = 0x2000, scoped, tag = 'input window, operand 1, single buffered']
    #allocation6 [shape = 's32[1]{0}', space=sflag, size = 0x4, scoped, tag = 'scoped memory for tpu_custom_call.1']
    #allocation7 [shape = 'u8[32768]{0}', space=vmem, size = 0x8000, scoped, tag = 'input window, operand 3, single buffered']
    #allocation8 [shape = 'u8[8192]{0}', space=vmem, size = 0x2000, scoped, tag = 'output window, operand 0, single buffered']
    %10 = vsyncpa [#allocation3], 0
    %11 = vsyncpa [#allocation6], 0
    %12 = vsyncpa [#allocation4], 0
    // Predicated region
    $region2: #{tpu_custom_call.1} parent=1 // pred_check
      _
    $region3: #{tpu_custom_call.1} parent=1 // pred_check_branch
      %14 = sbr.rel (0) target = $region5
    $region4: #{tpu_custom_call.1} parent=1 // pred_region
      %16 = vsyncadd [#allocation3], 0
      %s17 = sshll.u32 %s0, 4
      %s18 = int_to_ptr.hbm [resolvable:$true] %s17
      %s19 = sshll.u32 [#allocation2], 4
      %s20 = int_to_ptr.vmem [resolvable:$true] %s19
      %25 = dma.hbm_to_vmem [thread:$0]  %s18, 128, %s20, [#allocation3], 64, 64, 4
    $region5: #{tpu_custom_call.1} parent=1 // pred_fallthru
      _
    // Predicated region
    $region6: #{tpu_custom_call.1} parent=1 // pred_check
      _
    $region7: #{tpu_custom_call.1} parent=1 // pred_check_branch
      %27 = sbr.rel (0) target = $region9
    $region8: #{tpu_custom_call.1} parent=1 // pred_region
      %29 = vsyncadd [#allocation6], 0
      %s30 = sshll.u32 %s1, 4
      %s31 = int_to_ptr.hbm [resolvable:$true] %s30
      %s32 = sshll.u32 [#allocation5], 4
      %s33 = int_to_ptr.vmem [resolvable:$true] %s32
      %38 = dma.hbm_to_vmem [thread:$0]  %s31, 256, %s33, [#allocation6], 64, 64, 4
    $region9: #{tpu_custom_call.1} parent=1 // pred_fallthru
      _
    // Predicated region
    $region10: #{tpu_custom_call.1} parent=1 // pred_check
      _
    $region11: #{tpu_custom_call.1} parent=1 // pred_check_branch
      %40 = sbr.rel (0) target = $region13
    $region12: #{tpu_custom_call.1} parent=1 // pred_region
      _
    $region13: #{tpu_custom_call.1} parent=1 // pred_fallthru
      _
    // Predicated region
    $region14: #{tpu_custom_call.1} parent=1 // pred_check
      _
    $region15: #{tpu_custom_call.1} parent=1 // pred_check_branch
      %42 = sbr.rel (0) target = $region17
    $region16: #{tpu_custom_call.1} parent=1 // pred_region
      %44 = vsyncadd [#allocation6], 0
      %s45 = sshll.u32 %s3, 4
      %s46 = int_to_ptr.hbm [resolvable:$true] %s45
      %s47 = sshll.u32 [#allocation7], 4
      %s48 = int_to_ptr.vmem [resolvable:$true] %s47
      %53 = dma.hbm_to_vmem [thread:$0]  %s46, 1024, %s48, [#allocation6], 64, 64, 4
    $region17: #{tpu_custom_call.1} parent=1 // pred_fallthru
      _
    // Predicated region
    $region18: #{tpu_custom_call.1} parent=1 // pred_check
      _
    $region19: #{tpu_custom_call.1} parent=1 // pred_check_branch
      %55 = sbr.rel (0) target = $region21
    $region20: #{tpu_custom_call.1} parent=1 // pred_region
      _
    $region21: #{tpu_custom_call.1} parent=1 // pred_fallthru
      _
    // Predicated region
    $region22: #{tpu_custom_call.1} parent=1 // pred_check
      _
    $region23: #{tpu_custom_call.1} parent=1 // pred_check_branch
      %57 = sbr.rel (0) target = $region25
    $region24: #{tpu_custom_call.1} parent=1 // pred_region
      %59 = dma.done [#allocation3], 128
    $region25: #{tpu_custom_call.1} parent=1 // pred_fallthru
      _
    // Predicated region
    $region26: #{tpu_custom_call.1} parent=1 // pred_check
      _
    $region27: #{tpu_custom_call.1} parent=1 // pred_check_branch
      %61 = sbr.rel (0) target = $region29
    $region28: #{tpu_custom_call.1} parent=1 // pred_region
      %63 = dma.done [#allocation6], 256
    $region29: #{tpu_custom_call.1} parent=1 // pred_fallthru
      _
    // Predicated region
    $region30: #{tpu_custom_call.1} parent=1 // pred_check
      _
    $region31: #{tpu_custom_call.1} parent=1 // pred_check_branch
      %65 = sbr.rel (0) target = $region33
    $region32: #{tpu_custom_call.1} parent=1 // pred_region
      %67 = dma.done [#allocation6], 1024
    $region33: #{tpu_custom_call.1} parent=1 // pred_fallthru
      _
    %v69 = vld [vmem:[#allocation2] sm:$0xf]
    %v70 = vld [vmem:[#allocation2 + $0x4] sm:$0xf]
    %v71 = vld [vmem:[#allocation5] sm:$0xf]
    %v72 = vld [vmem:[#allocation5 + $0x4] sm:$0xf]
    %v73 = vld [vmem:[#allocation5 + $0x8] sm:$0xf]
    %v74 = vld [vmem:[#allocation5 + $0xc] sm:$0xf]
    %v75 = vld [vmem:[%s2] sm:$0x1]
    %v77 = vperm.slane %v75, 0
    %v81 = vunpack.c.l.b16 %v69
    %v82 = vunpack.c.l.b16 %v70
    %v83 = vpack.c.b16 %v82, %v81
    %v88 = vunpack.c.l.b16 %v71
    %v89 = vunpack.c.l.b16 %v72
    %v90 = vunpack.c.l.b16 %v73
    %v91 = vunpack.c.l.b16 %v74
    %v92 = vpack.c.b16 %v89, %v88
    %v93 = vpack.c.b16 %v91, %v90
    %vm96 = vcmask 261120
    %v98 = vsel %vm96, %v83, 0
    %100 = vmatpush.bf16.msra.mxu0 0
    %101 = vmatpush.bf16.msra.mxu0 0
    %102 = vmatpush.bf16.msra.mxu0 0
    %103 = vmatpush.bf16.msra.mxu0 0
    %104 = vmatpush.bf16.msra.mxu0 0
    %105 = vmatpush.bf16.msra.mxu0 0
    %106 = vmatpush.bf16.msra.mxu0 %v93
    %107 = vmatpush.bf16.msra.mxu0 %v92
    %108 = vmatmul.bf16.gmra.mxu0 %v98
    %v109 = vpop.f32.mrf.mxu0
    %v110 = vadd.f32 %v77, %v109
    %v111 = vpop.f32.mrf.mxu0
    %v112 = vadd.f32 %v77, %v111
    %113 = vdwg.mxu0
    %v114 = vmax.f32 %v110, 0.0
    %v115 = vmax.f32 %v112, 0.0
    %v116 = vpack.c.bf16 %v115, %v114
    %v117 = vld [vmem:[#allocation7] sm:$0xf]
    %v118 = vld [vmem:[#allocation7 + $0x4] sm:$0xf]
    %v119 = vld [vmem:[#allocation7 + $0x8] sm:$0xf]
    %v120 = vld [vmem:[#allocation7 + $0xc] sm:$0xf]
    %v121 = vld [vmem:[#allocation7 + $0x10] sm:$0xf]
    %v122 = vld [vmem:[#allocation7 + $0x14] sm:$0xf]
    %v123 = vld [vmem:[#allocation7 + $0x18] sm:$0xf]
    %v124 = vld [vmem:[#allocation7 + $0x1c] sm:$0xf]
    %v125 = vld [vmem:[#allocation7 + $0x20] sm:$0xf]
    %v126 = vld [vmem:[#allocation7 + $0x24] sm:$0xf]
    %v127 = vld [vmem:[#allocation7 + $0x28] sm:$0xf]
    %v128 = vld [vmem:[#allocation7 + $0x2c] sm:$0xf]
    %v129 = vld [vmem:[#allocation7 + $0x30] sm:$0xf]
    %v130 = vld [vmem:[#allocation7 + $0x34] sm:$0xf]
    %v131 = vld [vmem:[#allocation7 + $0x38] sm:$0xf]
    %v132 = vld [vmem:[#allocation7 + $0x3c] sm:$0xf]
    %v133 = vld [vmem:[%s4] sm:$0x1]
    %v135 = vperm.slane %v133, 0
    %v153 = vunpack.c.l.b16 %v117
    %v154 = vunpack.c.l.b16 %v118
    %v155 = vunpack.c.l.b16 %v119
    %v156 = vunpack.c.l.b16 %v120
    %v157 = vunpack.c.l.b16 %v121
    %v158 = vunpack.c.l.b16 %v122
    %v159 = vunpack.c.l.b16 %v123
    %v160 = vunpack.c.l.b16 %v124
    %v161 = vunpack.c.l.b16 %v125
    %v162 = vunpack.c.l.b16 %v126
    %v163 = vunpack.c.l.b16 %v127
    %v164 = vunpack.c.l.b16 %v128
    %v165 = vunpack.c.l.b16 %v129
    %v166 = vunpack.c.l.b16 %v130
    %v167 = vunpack.c.l.b16 %v131
    %v168 = vunpack.c.l.b16 %v132
    %v169 = vpack.c.b16 %v154, %v153
    %v170 = vpack.c.b16 %v156, %v155
    %v171 = vpack.c.b16 %v158, %v157
    %v172 = vpack.c.b16 %v160, %v159
    %v173 = vpack.c.b16 %v162, %v161
    %v174 = vpack.c.b16 %v164, %v163
    %v175 = vpack.c.b16 %v166, %v165
    %v176 = vpack.c.b16 %v168, %v167
    %185 = vmatpush.bf16.msra.mxu0 %v176
    %186 = vmatpush.bf16.msra.mxu0 %v175
    %187 = vmatpush.bf16.msra.mxu0 %v174
    %188 = vmatpush.bf16.msra.mxu0 %v173
    %189 = vmatpush.bf16.msra.mxu0 %v172
    %190 = vmatpush.bf16.msra.mxu0 %v171
    %191 = vmatpush.bf16.msra.mxu0 %v170
    %192 = vmatpush.bf16.msra.mxu0 %v169
    %193 = vmatmul.bf16.gmra.mxu0 %v116
    %v194 = vpop.f32.mrf.mxu0
    %v195 = vadd.f32 %v135, %v194
    %v196 = vpop.f32.mrf.mxu0
    %v197 = vadd.f32 %v135, %v196
    %198 = vdwg.mxu0
    %199 = vst [vmem:[#allocation8] sm:$0xff] %v195
    %200 = vst [vmem:[#allocation8 + $0x8] sm:$0xff] %v197
    // Predicated region
    $region34: #{tpu_custom_call.1} parent=1 // pred_check
      _
    $region35: #{tpu_custom_call.1} parent=1 // pred_check_branch
      %202 = sbr.rel (0) target = $region37
    $region36: #{tpu_custom_call.1} parent=1 // pred_region
      %204 = vsyncadd [#allocation4], 0
      %s205 = sshll.u32 [#allocation8], 4
      %s206 = int_to_ptr.vmem [resolvable:$true] %s205
      %s207 = sshll.u32 %s5, 4
      %s208 = int_to_ptr.hbm [resolvable:$true] %s207
      %213 = dma.vmem_to_hbm [thread:$0]  %s206, 256, %s208, [#allocation4], 128, 128, 8
    $region37: #{tpu_custom_call.1} parent=1 // pred_fallthru
      _
    // Predicated region
    $region38: #{tpu_custom_call.1} parent=1 // pred_check
      _
    $region39: #{tpu_custom_call.1} parent=1 // pred_check_branch
      %215 = sbr.rel (0) target = $region41
    $region40: #{tpu_custom_call.1} parent=1 // pred_region
      %217 = dma.done [#allocation4], 256
    $region41: #{tpu_custom_call.1} parent=1 // pred_fallthru
      _
    %218 = vsyncpa [#allocation3], 1
    %219 = vsyncpa [#allocation6], 1
    %220 = vsyncpa [#allocation4], 1

</llo_original>
